<compile_context>
chip_gen: v7x
topology: tpu7x:2x2x1
jax: 0.10.0
libtpu: 0.0.40
codegen_flags: <defaults>
</compile_context>

<pallas_src>
import functools
import math

import jax
import jax.numpy as jnp
from jax import lax
from jax.experimental import pallas as pl
from jax.experimental.pallas import tpu as pltpu


def _round_up(x, m):
    return ((x + m - 1) // m) * m


def _default_vmem_limit_bytes():
    """Per-generation scoped-VMEM budget: ~3/4 of physical, capped at 96 MiB.

    v7x: 64 MiB/TC -> 48 MiB; v5e/v6e: 128 MiB -> 96 MiB.  Falls back to the
    smallest (v7x) assumption if the hardware query is unavailable.
    """
    try:
        phys = pltpu.get_tpu_info().vmem_capacity_bytes
    except Exception:
        phys = 64 << 20
    return min(int(phys * 3 // 4), 96 << 20)


# ---------------------------------------------------------------------------
# Kernel 1: fused Q|K|V projection, runs once over the (padded) sequence.
#   qkv = x @ [Wq|Wk|Wv] + [bq|bk|bv]   (compute_dtype operands, f32 MXU acc)
#   Q is pre-scaled by 1/sqrt(d_out) so the flash kernel does no extra scaling.
# ---------------------------------------------------------------------------
def _qkv_proj_kernel(x_ref, w_ref, b_ref, q_ref, k_ref, v_ref, *, d_pad, scale):
    qkv = jnp.dot(x_ref[...], w_ref[...],
                  preferred_element_type=jnp.float32) + b_ref[...]
    q_ref[...] = (qkv[:, :d_pad] * scale).astype(q_ref.dtype)
    k_ref[...] = qkv[:, d_pad:2 * d_pad].astype(k_ref.dtype)
    v_ref[...] = qkv[:, 2 * d_pad:].astype(v_ref.dtype)


# ---------------------------------------------------------------------------
# Kernel 2: flash attention over pre-projected (and pre-scaled) Q, K, V tiles.
# ---------------------------------------------------------------------------
def _flash_attn_kernel(q_ref, k_ref, v_ref, o_ref, m_scr, l_scr, acc_scr,
                       *, seq_len, tk, masked):
    ki = pl.program_id(1)

    @pl.when(ki == 0)
    def _init():
        m_scr[...] = jnp.full(m_scr.shape, -jnp.inf, dtype=m_scr.dtype)
        l_scr[...] = jnp.zeros(l_scr.shape, dtype=l_scr.dtype)
        acc_scr[...] = jnp.zeros(acc_scr.shape, dtype=acc_scr.dtype)

    # scores = (scaled Q) @ K^T, contracting on the last dims of both operands
    # (no explicit K transpose / XLU relayout).
    s = lax.dot_general(q_ref[...], k_ref[...],
                        dimension_numbers=(((1,), (1,)), ((), ())),
                        preferred_element_type=jnp.float32)

    if masked:  # static flag: only emitted when the sequence was row-padded
        key_idx = ki * tk + lax.broadcasted_iota(jnp.int32, s.shape, 1)
        s = jnp.where(key_idx < seq_len, s, -1e30)

    # Online (streaming) softmax update, all in f32.
    m_prev = m_scr[...]
    m_new = jnp.maximum(m_prev, jnp.max(s, axis=-1, keepdims=True))
    alpha = jnp.exp(m_prev - m_new)
    p = jnp.exp(s - m_new)
    l_scr[...] = alpha * l_scr[...] + jnp.sum(p, axis=-1, keepdims=True)
    acc_scr[...] = alpha * acc_scr[...] + jnp.dot(
        p.astype(v_ref.dtype), v_ref[...], preferred_element_type=jnp.float32)
    m_scr[...] = m_new

    @pl.when(ki == pl.num_programs(1) - 1)
    def _finalize():
        # Exact divide: once per q-tile, negligible cost, tight numerics.
        o_ref[...] = (acc_scr[...] / l_scr[...]).astype(o_ref.dtype)


def self_attention_v2(x, w_q, b_q, w_k, b_k, w_v, b_v, *,
                      block_q=None, block_k=None,
                      compute_dtype=jnp.bfloat16):
    """x: (seq, d_in); w_*: (d_in, d_out); b_*: (d_out,) or (1, d_out).

    Returns (seq, d_out) context vectors in x.dtype.  `compute_dtype` is the dtype
    fed to the MXU matmuls (bf16 recommended on all generations); softmax and
    accumulation stay float32.
    """
    seq, d_in = x.shape
    d_out = w_q.shape[1]
    scale = 1.0 / (d_out ** 0.5)
    out_dtype = x.dtype

    # Lane-dense projection width; zero-padded columns keep the math exact.
    d_pad = _round_up(d_out, 128)

    # --- tile / sequence-padding selection -----------------------------------
    preferred = 512
    if block_q is None and block_k is None:
        if seq <= preferred:
            tq = tk = _round_up(seq, 8)          # single tile, sublane aligned
        else:
            tq = tk = preferred                  # MXU-sized tiles for long seq
    else:
        tq = block_q or min(preferred, _round_up(seq, 8))
        tk = block_k or min(preferred, _round_up(seq, 8))
    assert tq % 8 == 0 and tk % 8 == 0, "tile sizes must be multiples of 8"
    seq_pad = _round_up(seq, math.lcm(tq, tk))
    # v7x megacore: keep the parallel (qi) grid extent even so both TCs stay busy.
    if (seq_pad // tq) % 2 == 1 and seq_pad // tq > 1 and tq % 256 == 0:
        tq //= 2
    masked = seq_pad != seq
    vmem_limit = _default_vmem_limit_bytes()

    # --- operand preparation (padding + compute dtype) ------------------------
    x_p = x
    if masked:
        x_p = jnp.pad(x, ((0, seq_pad - seq), (0, 0)))
    x_p = x_p.astype(compute_dtype)

    def pad_w(w):
        return jnp.pad(w, ((0, 0), (0, d_pad - d_out))).astype(compute_dtype)

    def pad_b(b):
        return jnp.pad(jnp.asarray(b, jnp.float32).reshape(1, -1),
                       ((0, 0), (0, d_pad - d_out)))

    w_qkv = jnp.concatenate([pad_w(w_q), pad_w(w_k), pad_w(w_v)], axis=1)  # (d_in, 3*d_pad)
    b_qkv = jnp.concatenate([pad_b(b_q), pad_b(b_k), pad_b(b_v)], axis=1)  # (1, 3*d_pad)

    # --- 1) fused Q|K|V projection (runs once) --------------------------------
    proj_kernel = functools.partial(_qkv_proj_kernel, d_pad=d_pad, scale=scale)
    q, k, v = pl.pallas_call(
        proj_kernel,
        out_shape=(jax.ShapeDtypeStruct((seq_pad, d_pad), compute_dtype),) * 3,
        grid=(seq_pad // tq,),
        in_specs=[
            pl.BlockSpec((tq, d_in), lambda i: (i, 0)),
            pl.BlockSpec((d_in, 3 * d_pad), lambda i: (0, 0)),
            pl.BlockSpec((1, 3 * d_pad), lambda i: (0, 0)),
        ],
        out_specs=[pl.BlockSpec((tq, d_pad), lambda i: (i, 0))] * 3,
        compiler_params=pltpu.CompilerParams(
            dimension_semantics=("parallel",),
            vmem_limit_bytes=vmem_limit,
        ),
    )(x_p, w_qkv, b_qkv)

    # --- 2) flash attention over pre-projected tiles ---------------------------
    flash_kernel = functools.partial(
        _flash_attn_kernel, seq_len=seq, tk=tk, masked=masked)
    out_pad = pl.pallas_call(
        flash_kernel,
        out_shape=jax.ShapeDtypeStruct((seq_pad, d_pad), out_dtype),
        grid=(seq_pad // tq, seq_pad // tk),
        in_specs=[
            # Q tile: resident across the kv (reduction) axis.
            pl.BlockSpec((tq, d_pad), lambda qi, ki: (qi, 0)),
            # Streamed pre-projected K / V tiles.
            pl.BlockSpec((tk, d_pad), lambda qi, ki: (ki, 0)),
            pl.BlockSpec((tk, d_pad), lambda qi, ki: (ki, 0)),
        ],
        out_specs=pl.BlockSpec((tq, d_pad), lambda qi, ki: (qi, 0)),
        scratch_shapes=[
            pltpu.VMEM((tq, 1), jnp.float32),      # running max m
            pltpu.VMEM((tq, 1), jnp.float32),      # running denom l
            pltpu.VMEM((tq, d_pad), jnp.float32),  # output accumulator
        ],
        compiler_params=pltpu.CompilerParams(
            dimension_semantics=("parallel", "arbitrary"),
            vmem_limit_bytes=vmem_limit,
        ),
    )(q, k, v)

    # Slice off the padded rows / columns (padded output columns are exact zeros).
    return out_pad[:seq, :d_out]


def _reference(x, w_q, b_q, w_k, b_k, w_v, b_v):
    q = x @ w_q + b_q
    k = x @ w_k + b_k
    v = x @ w_v + b_v
    d_out = w_q.shape[1]
    scores = q @ k.T / (d_out ** 0.5)
    w = jax.nn.softmax(scores, axis=-1)
    return w @ v


if __name__ == "__main__":
    seq, d_in, d_out = 8, 32, 16

    key = jax.random.PRNGKey(0)
    kx, kq, kbq, kk, kbk, kv, kbv = jax.random.split(key, 7)

    # Deterministic parameter init (mimics nn.Linear's uniform(-1/sqrt(d_in), 1/sqrt(d_in))).
    bound = 1.0 / (d_in ** 0.5)
    x = jax.random.normal(kx, (seq, d_in), dtype=jnp.float32)
    w_q = jax.random.uniform(kq, (d_in, d_out), jnp.float32, -bound, bound)
    b_q = jax.random.uniform(kbq, (1, d_out), jnp.float32, -bound, bound)
    w_k = jax.random.uniform(kk, (d_in, d_out), jnp.float32, -bound, bound)
    b_k = jax.random.uniform(kbk, (1, d_out), jnp.float32, -bound, bound)
    w_v = jax.random.uniform(kv, (d_in, d_out), jnp.float32, -bound, bound)
    b_v = jax.random.uniform(kbv, (1, d_out), jnp.float32, -bound, bound)

    ref = _reference(x, w_q, b_q, w_k, b_k, w_v, b_v)

    # Full-precision path (f32 MXU operands) -- tight check.
    out_f32 = self_attention_v2(x, w_q, b_q, w_k, b_k, w_v, b_v,
                                compute_dtype=jnp.float32)
    out_f32 = jax.block_until_ready(out_f32)
    assert out_f32.shape == (seq, d_out)
    assert jnp.allclose(out_f32, ref, atol=2e-3, rtol=2e-3), "f32 path mismatch vs reference"

    # Default fast path (bf16 MXU operands, f32 softmax/accumulation) -- loose check.
    out_bf16 = jax.block_until_ready(
        self_attention_v2(x, w_q, b_q, w_k, b_k, w_v, b_v))
    assert out_bf16.shape == (seq, d_out)
    assert jnp.allclose(out_bf16, ref, atol=3e-2, rtol=3e-2), "bf16 path mismatch vs reference"

    print("KERNEL_OK")
</pallas_src>

<mosaic_0001>
module attributes {stable_mosaic.version = 11 : i64} {
  func.func @_qkv_proj_kernel(%arg0: i32, %arg1: memref<8x32xf32, #tpu.memory_space<vmem>>, %arg2: memref<32x384xf32, #tpu.memory_space<vmem>>, %arg3: memref<1x384xf32, #tpu.memory_space<vmem>>, %arg4: memref<8x128xf32, #tpu.memory_space<vmem>>, %arg5: memref<8x128xf32, #tpu.memory_space<vmem>>, %arg6: memref<8x128xf32, #tpu.memory_space<vmem>>) attributes {dimension_semantics = [#tpu.dimension_semantics<parallel>], iteration_bounds = array<i64: 1>, scalar_prefetch = 0 : i64, scratch_operands = 0 : i64, tpu.core_type = #tpu.core_type<tc>, window_params = [{transform_indices = @transform_0, window_bounds = array<i64: 8, 32>}, {pipeline_mode = #tpu.pipeline_mode<synchronous>, transform_indices = @transform_1, window_bounds = array<i64: 32, 384>}, {pipeline_mode = #tpu.pipeline_mode<synchronous>, transform_indices = @transform_2, window_bounds = array<i64: 1, 384>}, {transform_indices = @transform_3, window_bounds = array<i64: 8, 128>}, {transform_indices = @transform_4, window_bounds = array<i64: 8, 128>}, {transform_indices = @transform_5, window_bounds = array<i64: 8, 128>}]} {
    %c0 = arith.constant 0 : index
    %c0_0 = arith.constant 0 : index
    %0 = vector.load %arg1[%c0, %c0_0] : memref<8x32xf32, #tpu.memory_space<vmem>>, vector<8x32xf32>
    %c0_1 = arith.constant 0 : index
    %c0_2 = arith.constant 0 : index
    %1 = vector.load %arg2[%c0_1, %c0_2] : memref<32x384xf32, #tpu.memory_space<vmem>>, vector<32x384xf32>
    %cst = arith.constant dense<0.000000e+00> : vector<8x384xf32>
    %2 = tpu.matmul %0, %1, %cst {dimension_numbers = #tpu.dot_dimension_numbers<[1], [0], [0], [1], [0, 0, 1, 1], [], []>} : vector<8x32xf32>, vector<32x384xf32>, vector<8x384xf32> -> vector<8x384xf32>
    %c0_3 = arith.constant 0 : index
    %c0_4 = arith.constant 0 : index
    %3 = vector.load %arg3[%c0_3, %c0_4] : memref<1x384xf32, #tpu.memory_space<vmem>>, vector<1x384xf32>
    %4 = vector.broadcast %3 : vector<1x384xf32> to vector<8x384xf32>
    %5 = arith.addf %2, %4 : vector<8x384xf32>
    %6 = vector.extract_strided_slice %5 {offsets = [0, 0], sizes = [8, 128], strides = [1, 1]} : vector<8x384xf32> to vector<8x128xf32>
    %cst_5 = arith.constant 2.500000e-01 : f32
    %7 = vector.broadcast %cst_5 : f32 to vector<8x128xf32>
    %8 = arith.mulf %6, %7 : vector<8x128xf32>
    %c0_6 = arith.constant 0 : index
    %c0_7 = arith.constant 0 : index
    %9 = vector.load %arg4[%c0_6, %c0_7] : memref<8x128xf32, #tpu.memory_space<vmem>>, vector<8x128xf32>
    tpu.vector_store %arg4[%c0_6, %c0_7], %8 {strides = array<i32>} : memref<8x128xf32, #tpu.memory_space<vmem>>, vector<8x128xf32>,
    %10 = vector.extract_strided_slice %5 {offsets = [0, 128], sizes = [8, 128], strides = [1, 1]} : vector<8x384xf32> to vector<8x128xf32>
    %c0_8 = arith.constant 0 : index
    %c0_9 = arith.constant 0 : index
    %11 = vector.load %arg5[%c0_8, %c0_9] : memref<8x128xf32, #tpu.memory_space<vmem>>, vector<8x128xf32>
    tpu.vector_store %arg5[%c0_8, %c0_9], %10 {strides = array<i32>} : memref<8x128xf32, #tpu.memory_space<vmem>>, vector<8x128xf32>,
    %12 = vector.extract_strided_slice %5 {offsets = [0, 256], sizes = [8, 128], strides = [1, 1]} : vector<8x384xf32> to vector<8x128xf32>
    %c0_10 = arith.constant 0 : index
    %c0_11 = arith.constant 0 : index
    %13 = vector.load %arg6[%c0_10, %c0_11] : memref<8x128xf32, #tpu.memory_space<vmem>>, vector<8x128xf32>
    tpu.vector_store %arg6[%c0_10, %c0_11], %12 {strides = array<i32>} : memref<8x128xf32, #tpu.memory_space<vmem>>, vector<8x128xf32>,
    return
  }
  func.func @transform_0(%arg0: i32) -> (i32, i32) {
    %c0_i32 = arith.constant 0 : i32
    %c0_i32_0 = arith.constant 0 : i32
    return %arg0, %c0_i32 : i32, i32
  }
  func.func @transform_1(%arg0: i32) -> (i32, i32) {
    %c0_i32 = arith.constant 0 : i32
    %c0_i32_0 = arith.constant 0 : i32
    %c0_i32_1 = arith.constant 0 : i32
    return %c0_i32, %c0_i32_0 : i32, i32
  }
  func.func @transform_2(%arg0: i32) -> (i32, i32) {
    %c0_i32 = arith.constant 0 : i32
    %c0_i32_0 = arith.constant 0 : i32
    %c0_i32_1 = arith.constant 0 : i32
    return %c0_i32, %c0_i32_0 : i32, i32
  }
  func.func @transform_3(%arg0: i32) -> (i32, i32) {
    %c0_i32 = arith.constant 0 : i32
    %c0_i32_0 = arith.constant 0 : i32
    return %arg0, %c0_i32 : i32, i32
  }
  func.func @transform_4(%arg0: i32) -> (i32, i32) {
    %c0_i32 = arith.constant 0 : i32
    %c0_i32_0 = arith.constant 0 : i32
    return %arg0, %c0_i32 : i32, i32
  }
  func.func @transform_5(%arg0: i32) -> (i32, i32) {
    %c0_i32 = arith.constant 0 : i32
    %c0_i32_0 = arith.constant 0 : i32
    return %arg0, %c0_i32 : i32, i32
  }
}

</mosaic_0001>

<llo_original>
// kernel: tpu_custom_call.1
$region0: #{tpu_custom_call.1}
  #allocation0 [shape = 'u32[]', space=smem, size = 0x4, offset = 0x4, fixed_abs, tag = 'smem constant byte address 0x4 - core index']
  #allocation1 [shape = 'u32[144,128]{1,0:T(1,128)}', space=vmem, size = 0x12000, scoped, tag = 'internal scratch']
  %s0 = inlined_call_operand.hbm [shape: f32[8,32], index: 0, kind: input, shape index: {}]
  %s1 = inlined_call_operand.hbm [shape: f32[32,384], index: 1, kind: input, shape index: {}]
  %s2 = inlined_call_operand.vmem [shape: f32[1,384], index: 2, kind: input, shape index: {}]
  %s3 = inlined_call_operand.hbm [shape: f32[8,128], index: 3, kind: output, shape index: {0}]
  %s4 = inlined_call_operand.hbm [shape: f32[8,128], index: 4, kind: output, shape index: {1}]
  %s5 = inlined_call_operand.hbm [shape: f32[8,128], index: 5, kind: output, shape index: {2}]
  %6 = xla_tuple %s3, %s4, %s5
  %s7 = sld [smem:[#allocation0]]
  $region46: #{tpu_custom_call.1} parent=0
    _
  %s9 = ssub.s32 1, %s7
  %s10 = scalar_select 0, %s9, %s7
  $region1: #{tpu_custom_call.1} parent=0
    #allocation2 [shape = 'u8[4096]{0}', space=vmem, size = 0x1000, scoped, tag = 'input window, operand 0, single buffered']
    #allocation3 [shape = 's32[1]{0}', space=sflag, size = 0x4, scoped, tag = 'scoped memory for tpu_custom_call.1']
    #allocation4 [shape = 's32[1]{0}', space=sflag, size = 0x4, scoped, tag = 'scoped memory for tpu_custom_call.1']
    #allocation5 [shape = 'u8[49152]{0}', space=vmem, size = 0xc000, scoped, tag = 'input window, operand 1, single buffered']
    #allocation6 [shape = 's32[1]{0}', space=sflag, size = 0x4, scoped, tag = 'scoped memory for tpu_custom_call.1']
    #allocation7 [shape = 'u8[4096]{0}', space=vmem, size = 0x1000, scoped, tag = 'output window, operand 0, single buffered']
    #allocation8 [shape = 'u8[4096]{0}', space=vmem, size = 0x1000, scoped, tag = 'output window, operand 1, single buffered']
    #allocation9 [shape = 's32[1]{0}', space=sflag, size = 0x4, scoped, tag = 'scoped memory for tpu_custom_call.1']
    #allocation10 [shape = 'u8[4096]{0}', space=vmem, size = 0x1000, scoped, tag = 'output window, operand 2, single buffered']
    %11 = vsyncpa [#allocation3], 0
    %12 = vsyncpa [#allocation6], 0
    %13 = vsyncpa [#allocation4], 0
    %14 = vsyncpa [#allocation9], 0
    // Predicated region
    $region2: #{tpu_custom_call.1} parent=1 // pred_check
      _
    $region3: #{tpu_custom_call.1} parent=1 // pred_check_branch
      %16 = sbr.rel (0) target = $region5
    $region4: #{tpu_custom_call.1} parent=1 // pred_region
      %s18 = ssub.s32 128, 128
      %19 = vsyncadd [#allocation3], %s18
      %s21 = sshll.u32 [#allocation2], 4
      %s22 = int_to_ptr.vmem [resolvable:$true] %s21
      %24 = dma.hbm_to_vmem [thread:$0]  %s0, 128, %s22, [#allocation3]
    $region5: #{tpu_custom_call.1} parent=1 // pred_fallthru
      _
    // Predicated region
    $region6: #{tpu_custom_call.1} parent=1 // pred_check
      _
    $region7: #{tpu_custom_call.1} parent=1 // pred_check_branch
      %26 = sbr.rel (0) target = $region9
    $region8: #{tpu_custom_call.1} parent=1 // pred_region
      %s28 = ssub.s32 1536, 1536
      %29 = vsyncadd [#allocation6], %s28
      %s30 = sshll.u32 [#allocation5], 4
      %s31 = int_to_ptr.vmem [resolvable:$true] %s30
      %36 = dma.hbm_to_vmem [thread:$0]  %s1, 1536, %s31, [#allocation6], 384, 384, 24
    $region9: #{tpu_custom_call.1} parent=1 // pred_fallthru
      _
    // Predicated region
    $region10: #{tpu_custom_call.1} parent=1 // pred_check
      _
    $region11: #{tpu_custom_call.1} parent=1 // pred_check_branch
      %38 = sbr.rel (0) target = $region13
    $region12: #{tpu_custom_call.1} parent=1 // pred_region
      _
    $region13: #{tpu_custom_call.1} parent=1 // pred_fallthru
      _
    // Predicated region
    $region14: #{tpu_custom_call.1} parent=1 // pred_check
      _
    $region15: #{tpu_custom_call.1} parent=1 // pred_check_branch
      %40 = sbr.rel (0) target = $region17
    $region16: #{tpu_custom_call.1} parent=1 // pred_region
      %41 = dma.done [#allocation3], 128
    $region17: #{tpu_custom_call.1} parent=1 // pred_fallthru
      _
    // Predicated region
    $region18: #{tpu_custom_call.1} parent=1 // pred_check
      _
    $region19: #{tpu_custom_call.1} parent=1 // pred_check_branch
      %43 = sbr.rel (0) target = $region21
    $region20: #{tpu_custom_call.1} parent=1 // pred_region
      %44 = dma.done [#allocation6], 1536
    $region21: #{tpu_custom_call.1} parent=1 // pred_fallthru
      _
    %v45 = vld [vmem:[#allocation2] sm:$0xff]
    %v46 = vld [vmem:[#allocation5] sm:$0xff]
    %v47 = vld [vmem:[#allocation5 + $0x8] sm:$0xff]
    %v48 = vld [vmem:[#allocation5 + $0x10] sm:$0xff]
    %v49 = vld [vmem:[#allocation5 + $0x18] sm:$0xff]
    %v50 = vld [vmem:[#allocation5 + $0x20] sm:$0xff]
    %v51 = vld [vmem:[#allocation5 + $0x28] sm:$0xff]
    %v52 = vld [vmem:[#allocation5 + $0x30] sm:$0xff]
    %v53 = vld [vmem:[#allocation5 + $0x38] sm:$0xff]
    %v54 = vld [vmem:[#allocation5 + $0x40] sm:$0xff]
    %v55 = vld [vmem:[#allocation5 + $0x48] sm:$0xff]
    %v56 = vld [vmem:[#allocation5 + $0x50] sm:$0xff]
    %v57 = vld [vmem:[#allocation5 + $0x58] sm:$0xff]
    %v58 = vld [vmem:[%s2] sm:$0x7]
    %v60 = vlaneseq
    %v61 = vshrl.u32 %v60, 7
    %v62 = vsub.s32 0, %v61
    %v63 = vrot.slane %v58, %v62
    %v64 = vlaneseq
    %v65 = vshrl.u32 %v64, 7
    %v66 = vsub.s32 1, %v65
    %v67 = vrot.slane %v58, %v66
    %v68 = vlaneseq
    %v69 = vshrl.u32 %v68, 7
    %v70 = vsub.s32 2, %v69
    %v71 = vrot.slane %v58, %v70
    %vm75 = vcmask 261120
    %v77 = vsel %vm75, %v45, 0
    %79 = vmatprep.subr.mxu0 %v47
    %80 = vmatpush1.msra.mxu0 %v46
    %81 = vmatprep.subr.mxu0 %v50
    %82 = vmatpush1.msra.mxu0 %v49
    %83 = vmatprep.subr.mxu0 %v53
    %84 = vmatpush1.msra.mxu0 %v52
    %85 = vmatprep.subr.mxu0 %v56
    %86 = vmatpush1.msra.mxu0 %v55
    %87 = vmatprep.subr.mxu0 0.0
    %88 = vmatpush1.msra.mxu0 0.0
    %89 = vmatprep.subr.mxu0 0.0
    %90 = vmatpush1.msra.mxu0 0.0
    %91 = vmatprep.subr.mxu0 0.0
    %92 = vmatpush1.msra.mxu0 0.0
    %93 = vmatprep.subr.mxu0 0.0
    %94 = vmatpush1.msra.mxu0 0.0
    %95 = vmatprep.subr.mxu0 0.0
    %96 = vmatpush1.msra.mxu0 0.0
    %97 = vmatprep.subr.mxu0 0.0
    %98 = vmatpush1.msra.mxu0 0.0
    %99 = vmatprep.subr.mxu0 0.0
    %100 = vmatpush1.msra.mxu0 0.0
    %101 = vmatprep.subr.mxu0 0.0
    %102 = vmatpush1.msra.mxu0 0.0
    %103 = vmatprep.subr.mxu0 0.0
    %104 = vmatpush1.msra.mxu0 0.0
    %105 = vmatprep.subr.mxu0 0.0
    %106 = vmatpush1.msra.mxu0 0.0
    %107 = vmatprep.subr.mxu0 0.0
    %108 = vmatpush1.msra.mxu0 0.0
    %109 = vmatprep.subr.mxu0 0.0
    %110 = vmatpush1.msra.mxu0 0.0
    %111 = vmatprep.subr.mxu0 0.0
    %112 = vmatpush1.msra.mxu0 0.0
    %113 = vmatprep.subr.mxu0 0.0
    %114 = vmatpush1.msra.mxu0 0.0
    %115 = vmatprep.subr.mxu0 0.0
    %116 = vmatpush1.msra.mxu0 0.0
    %117 = vmatprep.subr.mxu0 0.0
    %118 = vmatpush1.msra.mxu0 0.0
    %119 = vmatprep.subr.mxu0 0.0
    %120 = vmatpush1.msra.mxu0 0.0
    %121 = vmatprep.subr.mxu0 0.0
    %122 = vmatpush1.msra.mxu0 0.0
    %123 = vmatprep.subr.mxu0 0.0
    %124 = vmatpush1.msra.mxu0 0.0
    %125 = vmatprep.subr.mxu0 0.0
    %126 = vmatpush1.msra.mxu0 0.0
    %127 = vmatprep.subr.mxu0 0.0
    %128 = vmatpush1.msra.mxu0 0.0
    %129 = vmatprep.subr.mxu0 0.0
    %130 = vmatpush1.msra.mxu0 0.0
    %131 = vmatprep.subr.mxu0 0.0
    %132 = vmatpush1.msra.mxu0 0.0
    %133 = vmatprep.subr.mxu0 0.0
    %134 = vmatpush1.msra.mxu0 0.0
    %135 = vmatprep.subr.mxu0 0.0
    %136 = vmatpush1.msra.mxu0 0.0
    %137 = vmatprep.subr.mxu0 0.0
    %138 = vmatpush1.msra.mxu0 0.0
    %139 = vmatprep.subr.mxu0 0.0
    %140 = vmatpush1.msra.mxu0 0.0
    %141 = vmatprep.subr.mxu0 0.0
    %142 = vmatpush1.msra.mxu0 0.0
    %143 = vmatprep.mubr.f32.mxu0 0.0
    %144 = vmatmul.mubr.f32.gmra.mrb[0].mxu0 %v77
    %v145 = vpop.f32.mrb[0].mxu0
    %v146 = vadd.f32 %v63, %v145
    %v147 = vpop.f32.mrb[0].mxu0
    %v148 = vadd.f32 %v67, %v147
    %149 = vdwg.mxu0
    %150 = vmatprep.subr.mxu0 0.0
    %151 = vmatpush1.msra.mxu0 %v48
    %152 = vmatprep.subr.mxu0 0.0
    %153 = vmatpush1.msra.mxu0 %v51
    %154 = vmatprep.subr.mxu0 0.0
    %155 = vmatpush1.msra.mxu0 %v54
    %156 = vmatprep.subr.mxu0 0.0
    %157 = vmatpush1.msra.mxu0 %v57
    %158 = vmatprep.subr.mxu0 0.0
    %159 = vmatpush1.msra.mxu0 0.0
    %160 = vmatprep.subr.mxu0 0.0
    %161 = vmatpush1.msra.mxu0 0.0
    %162 = vmatprep.subr.mxu0 0.0
    %163 = vmatpush1.msra.mxu0 0.0
    %164 = vmatprep.subr.mxu0 0.0
    %165 = vmatpush1.msra.mxu0 0.0
    %166 = vmatprep.subr.mxu0 0.0
    %167 = vmatpush1.msra.mxu0 0.0
    %168 = vmatprep.subr.mxu0 0.0
    %169 = vmatpush1.msra.mxu0 0.0
    %170 = vmatprep.subr.mxu0 0.0
    %171 = vmatpush1.msra.mxu0 0.0
    %172 = vmatprep.subr.mxu0 0.0
    %173 = vmatpush1.msra.mxu0 0.0
    %174 = vmatprep.subr.mxu0 0.0
    %175 = vmatpush1.msra.mxu0 0.0
    %176 = vmatprep.subr.mxu0 0.0
    %177 = vmatpush1.msra.mxu0 0.0
    %178 = vmatprep.subr.mxu0 0.0
    %179 = vmatpush1.msra.mxu0 0.0
    %180 = vmatprep.subr.mxu0 0.0
    %181 = vmatpush1.msra.mxu0 0.0
    %182 = vmatprep.subr.mxu0 0.0
    %183 = vmatpush1.msra.mxu0 0.0
    %184 = vmatprep.subr.mxu0 0.0
    %185 = vmatpush1.msra.mxu0 0.0
    %186 = vmatprep.subr.mxu0 0.0
    %187 = vmatpush1.msra.mxu0 0.0
    %188 = vmatprep.subr.mxu0 0.0
    %189 = vmatpush1.msra.mxu0 0.0
    %190 = vmatprep.subr.mxu0 0.0
    %191 = vmatpush1.msra.mxu0 0.0
    %192 = vmatprep.subr.mxu0 0.0
    %193 = vmatpush1.msra.mxu0 0.0
    %194 = vmatprep.subr.mxu0 0.0
    %195 = vmatpush1.msra.mxu0 0.0
    %196 = vmatprep.subr.mxu0 0.0
    %197 = vmatpush1.msra.mxu0 0.0
    %198 = vmatprep.subr.mxu0 0.0
    %199 = vmatpush1.msra.mxu0 0.0
    %200 = vmatprep.subr.mxu0 0.0
    %201 = vmatpush1.msra.mxu0 0.0
    %202 = vmatprep.subr.mxu0 0.0
    %203 = vmatpush1.msra.mxu0 0.0
    %204 = vmatprep.subr.mxu0 0.0
    %205 = vmatpush1.msra.mxu0 0.0
    %206 = vmatprep.subr.mxu0 0.0
    %207 = vmatpush1.msra.mxu0 0.0
    %208 = vmatprep.subr.mxu0 0.0
    %209 = vmatpush1.msra.mxu0 0.0
    %210 = vmatprep.subr.mxu0 0.0
    %211 = vmatpush1.msra.mxu0 0.0
    %212 = vmatprep.subr.mxu0 0.0
    %213 = vmatpush1.msra.mxu0 0.0
    %214 = vmatprep.mubr.f32.mxu0 0.0
    %215 = vmatmul.mubr.f32.gmra.mrb[0].mxu0 %v77
    %v216 = vpop.f32.mrb[0].mxu0
    %v217 = vadd.f32 %v71, %v216
    %v218 = vpop.f32.mrb[0].mxu0
    %219 = vdwg.mxu0
    %v220 = vmul.f32 %v146, 0.25
    %221 = vst [vmem:[#allocation7] sm:$0xff] %v220
    %222 = vst [vmem:[#allocation8] sm:$0xff] %v148
    %223 = vst [vmem:[#allocation10] sm:$0xff] %v217
    // Predicated region
    $region22: #{tpu_custom_call.1} parent=1 // pred_check
      _
    $region23: #{tpu_custom_call.1} parent=1 // pred_check_branch
      %225 = sbr.rel (0) target = $region25
    $region24: #{tpu_custom_call.1} parent=1 // pred_region
      %s227 = ssub.s32 128, 128
      %228 = vsyncadd [#allocation4], %s227
      %s230 = sshll.u32 [#allocation7], 4
      %s231 = int_to_ptr.vmem [resolvable:$true] %s230
      %233 = dma.vmem_to_hbm [thread:$0]  %s231, 128, %s3, [#allocation4]
    $region25: #{tpu_custom_call.1} parent=1 // pred_fallthru
      _
    // Predicated region
    $region26: #{tpu_custom_call.1} parent=1 // pred_check
      _
    $region27: #{tpu_custom_call.1} parent=1 // pred_check_branch
      %235 = sbr.rel (0) target = $region29
    $region28: #{tpu_custom_call.1} parent=1 // pred_region
      %s237 = ssub.s32 128, 128
      %238 = vsyncadd [#allocation9], %s237
      %s240 = sshll.u32 [#allocation8], 4
      %s241 = int_to_ptr.vmem [resolvable:$true] %s240
      %243 = dma.vmem_to_hbm [thread:$0]  %s241, 128, %s4, [#allocation9]
    $region29: #{tpu_custom_call.1} parent=1 // pred_fallthru
      _
    // Predicated region
    $region30: #{tpu_custom_call.1} parent=1 // pred_check
      _
    $region31: #{tpu_custom_call.1} parent=1 // pred_check_branch
      %245 = sbr.rel (0) target = $region33
    $region32: #{tpu_custom_call.1} parent=1 // pred_region
      %s247 = ssub.s32 128, 128
      %248 = vsyncadd [#allocation9], %s247
      %s250 = sshll.u32 [#allocation10], 4
      %s251 = int_to_ptr.vmem [resolvable:$true] %s250
      %253 = dma.vmem_to_hbm [thread:$0]  %s251, 128, %s5, [#allocation9]
    $region33: #{tpu_custom_call.1} parent=1 // pred_fallthru
      _
    // Predicated region
    $region34: #{tpu_custom_call.1} parent=1 // pred_check
      _
    $region35: #{tpu_custom_call.1} parent=1 // pred_check_branch
      %255 = sbr.rel (0) target = $region37
    $region36: #{tpu_custom_call.1} parent=1 // pred_region
      %256 = dma.done [#allocation4], 128
    $region37: #{tpu_custom_call.1} parent=1 // pred_fallthru
      _
    // Predicated region
    $region38: #{tpu_custom_call.1} parent=1 // pred_check
      _
    $region39: #{tpu_custom_call.1} parent=1 // pred_check_branch
      %258 = sbr.rel (0) target = $region41
    $region40: #{tpu_custom_call.1} parent=1 // pred_region
      %259 = dma.done [#allocation9], 128
    $region41: #{tpu_custom_call.1} parent=1 // pred_fallthru
      _
    // Predicated region
    $region42: #{tpu_custom_call.1} parent=1 // pred_check
      _
    $region43: #{tpu_custom_call.1} parent=1 // pred_check_branch
      %261 = sbr.rel (0) target = $region45
    $region44: #{tpu_custom_call.1} parent=1 // pred_region
      %262 = dma.done [#allocation9], 128
    $region45: #{tpu_custom_call.1} parent=1 // pred_fallthru
      _
    %263 = vsyncpa [#allocation3], 1
    %264 = vsyncpa [#allocation6], 1
    %265 = vsyncpa [#allocation4], 1
    %266 = vsyncpa [#allocation9], 1

</llo_original>
